<compile_context>
chip_gen: v7x
topology: tpu7x:2x2x1
jax: 0.10.0
libtpu: 0.0.40
codegen_flags: <defaults>
</compile_context>

<pallas_src>
import jax
import jax.numpy as jnp
from jax.experimental import pallas as pl
from jax.experimental.pallas import tpu as pltpu


def _round_up(v, m):
    return ((v + m - 1) // m) * m


def _embed_kernel(patch_ref, w_ref, pos_ref, out_ref):
    # patch_ref : (TB, TN, K)      bf16   patch rows for TB images
    # w_ref     : (K, hidden)      bf16   conv weight (resident, single buffer)
    # pos_ref   : (TN, hidden)     f32    position embedding + conv bias
    # out_ref   : (TB, TN, hidden)        output tile
    w = w_ref[...]
    pos = pos_ref[...]
    for b in range(patch_ref.shape[0]):              # static, small (TB)
        acc = jnp.dot(patch_ref[b], w, preferred_element_type=jnp.float32)
        out_ref[b] = (acc + pos).astype(out_ref.dtype)


def embeddings_forward(x, conv_w, conv_b, pos_emb, patch_size, *,
                       compute_dtype=jnp.bfloat16, out_dtype=None,
                       rows_per_step=512):
    """Patch-embedding forward.

    x: (B, C, H, W).  conv_w: (hidden, C, P, P).  conv_b: (hidden,).
    pos_emb: (1, num_patches, hidden).  Returns (B, N, hidden).
    """
    B, C, H, W = x.shape
    P = patch_size
    Hp, Wp = H // P, W // P
    N = Hp * Wp
    hidden = conv_w.shape[0]
    K = C * P * P
    out_dtype = x.dtype if out_dtype is None else out_dtype

    assert pos_emb.shape[-2] >= N, "position-embedding table shorter than num patches"
    assert pos_emb.shape[-1] == hidden and conv_b.shape == (hidden,)

    # ---- tiling --------------------------------------------------------------
    ROW_ALIGN = 16                                        # bf16 sublane packing
    Npad = _round_up(N, ROW_ALIGN)
    TN = min(Npad, _round_up(rows_per_step, ROW_ALIGN))   # patch rows per block
    Npad = _round_up(N, TN)
    TB = max(1, rows_per_step // TN)                      # images per block
    TB = min(TB, B, max(1, pl.cdiv(B, 2)))                # keep >= 2 grid steps
    Bpad = _round_up(B, TB)
    grid = (Bpad // TB, Npad // TN)

    # ---- wrapper glue (cheap, one pass each, done by XLA) --------------------
    # im2col: non-overlapping patches ordered (c, kh, kw) to match the PyTorch
    # Conv2d weight layout; patch index scans row-major over (Hp, Wp), matching
    # conv-output flatten(2).transpose(-1,-2).  Cast to bf16 first so the
    # transpose moves half the bytes.
    # TODO(synk): fusing this im2col into the kernel (reading (C, P, W) strips
    # of x and reordering in VMEM) would cut another ~4 bytes/elem of HBM
    # traffic, but the required lane<->sublane rank-5 transpose is not a
    # reliably-lowerable Mosaic pattern, so it stays on the XLA side for now.
    xc = x[:, :, :Hp * P, :Wp * P].astype(compute_dtype)
    patches = (xc.reshape(B, C, Hp, P, Wp, P)
                 .transpose(0, 2, 4, 1, 3, 5)
                 .reshape(B, N, K))
    if Bpad != B or Npad != N:
        patches = jnp.pad(patches, ((0, Bpad - B), (0, Npad - N), (0, 0)))

    # Weight: one-time (hidden, K) -> (K, hidden) transpose of a small tensor,
    # so the kernel uses a natural (rows, K) x (K, hidden) contraction.
    w = jnp.transpose(conv_w.reshape(hidden, K).astype(compute_dtype))

    # Position embedding with conv bias folded in; indexed by patch axis only
    # (NOT replicated across batch).
    pos = (pos_emb.reshape(-1, hidden)[:N].astype(jnp.float32)
           + conv_b.astype(jnp.float32)[None, :])
    if Npad != N:
        pos = jnp.pad(pos, ((0, Npad - N), (0, 0)))

    # ---- VMEM budget / cost hint ---------------------------------------------
    cbytes = jnp.dtype(compute_dtype).itemsize
    obytes = jnp.dtype(out_dtype).itemsize
    blk_bytes = (TB * TN * K * cbytes                 # patches block
                 + TB * TN * hidden * obytes          # output block
                 + TN * hidden * 4)                   # pos block
    vmem_est = 2 * blk_bytes + K * hidden * cbytes    # double-buffered + weight
    vmem_limit = int(min(max(2 * vmem_est, 32 * 1024 * 1024), 64 * 1024 * 1024))

    cost = pl.CostEstimate(
        flops=2 * Bpad * Npad * K * hidden,
        transcendentals=0,
        bytes_accessed=(Bpad * Npad * K * cbytes          # patches
                        + K * hidden * cbytes             # weight (fetched once)
                        + Npad * hidden * 4               # pos (+bias)
                        + Bpad * Npad * hidden * obytes)) # output

    out = pl.pallas_call(
        _embed_kernel,
        out_shape=jax.ShapeDtypeStruct((Bpad, Npad, hidden), out_dtype),
        grid_spec=pltpu.PrefetchScalarGridSpec(
            num_scalar_prefetch=0,
            grid=grid,
            in_specs=[
                pl.BlockSpec((TB, TN, K), lambda i, j: (i, j, 0)),       # patches
                pl.BlockSpec((K, hidden), lambda i, j: (0, 0),           # weight
                             pipeline_mode=pl.Buffered(1)),
                pl.BlockSpec((TN, hidden), lambda i, j: (j, 0)),         # pos+bias
            ],
            out_specs=pl.BlockSpec((TB, TN, hidden), lambda i, j: (i, j, 0)),
        ),
        compiler_params=pltpu.CompilerParams(
            dimension_semantics=("parallel", "parallel"),
            vmem_limit_bytes=vmem_limit),
        cost_estimate=cost,
    )(patches, w, pos)

    # TODO(synk): Dropout is identity in eval mode; training-mode dropout
    # (pltpu.prng_random_bits mask + 1/(1-p) scale) is not implemented here.
    return out[:B, :N, :]


if __name__ == "__main__":
    # config: tf_img_size=16, tf_in_channels=4, tf_patch_size=4,
    #         tf_hidden_size=32, tf_num_patches=16, tf_drop_prob=0.0
    B, C, IMG, P, HID = 2, 4, 16, 4, 32
    N = (IMG // P) * (IMG // P)

    key = jax.random.PRNGKey(0)
    kx, kw, kb, kp = jax.random.split(key, 4)

    x = jax.random.normal(kx, (B, C, IMG, IMG), dtype=jnp.float32)
    conv_w = jax.random.normal(kw, (HID, C, P, P), dtype=jnp.float32) * 0.02
    conv_b = jax.random.normal(kb, (HID,), dtype=jnp.float32) * 0.02
    # nn.Parameter(torch.zeros(1, num_patches, hidden)) is zeros in PyTorch;
    # use small deterministic randoms so the add is actually exercised.
    pos_emb = jax.random.normal(kp, (1, N, HID), dtype=jnp.float32) * 0.01

    out = embeddings_forward(x, conv_w, conv_b, pos_emb, P)
    out = jax.block_until_ready(out)

    # Reference with the same bf16-cast inputs (kernel accumulates in f32).
    patches_ref = (x.reshape(B, C, IMG // P, P, IMG // P, P)
                    .transpose(0, 2, 4, 1, 3, 5).reshape(B, N, -1))
    pr = patches_ref.astype(jnp.bfloat16).astype(jnp.float32)
    wr = conv_w.reshape(HID, -1).astype(jnp.bfloat16).astype(jnp.float32)
    ref = pr @ wr.T + conv_b[None, None, :] + pos_emb[:, :N, :]

    assert out.shape == (B, N, HID), out.shape
    assert jnp.allclose(out.astype(jnp.float32), ref, atol=2e-3, rtol=2e-3)

    print("KERNEL_OK")
</pallas_src>

<mosaic_0001>
module attributes {stable_mosaic.version = 11 : i64} {
  func.func @_embed_kernel(%arg0: i32, %arg1: i32, %arg2: memref<1x16x64xbf16, #tpu.memory_space<vmem>>, %arg3: memref<64x32xbf16, #tpu.memory_space<vmem>>, %arg4: memref<16x32xf32, #tpu.memory_space<vmem>>, %arg5: memref<1x16x32xf32, #tpu.memory_space<vmem>>) attributes {dimension_semantics = [#tpu.dimension_semantics<parallel>, #tpu.dimension_semantics<parallel>], iteration_bounds = array<i64: 2, 1>, scalar_prefetch = 0 : i64, scratch_operands = 0 : i64, tpu.core_type = #tpu.core_type<tc>, window_params = [{transform_indices = @transform_0, window_bounds = array<i64: 1, 16, 64>}, {pipeline_mode = #tpu.pipeline_mode<synchronous>, transform_indices = @transform_1, window_bounds = array<i64: 64, 32>}, {transform_indices = @transform_2, window_bounds = array<i64: 16, 32>}, {transform_indices = @transform_3, window_bounds = array<i64: 1, 16, 32>}]} {
    %c0 = arith.constant 0 : index
    %c0_0 = arith.constant 0 : index
    %0 = vector.load %arg3[%c0, %c0_0] : memref<64x32xbf16, #tpu.memory_space<vmem>>, vector<64x32xbf16>
    %c0_1 = arith.constant 0 : index
    %c0_2 = arith.constant 0 : index
    %1 = vector.load %arg4[%c0_1, %c0_2] : memref<16x32xf32, #tpu.memory_space<vmem>>, vector<16x32xf32>
    %c0_3 = arith.constant 0 : index
    %c0_4 = arith.constant 0 : index
    %c0_5 = arith.constant 0 : index
    %2 = vector.load %arg2[%c0_3, %c0_4, %c0_5] : memref<1x16x64xbf16, #tpu.memory_space<vmem>>, vector<1x16x64xbf16>
    %3 = vector.shape_cast %2 : vector<1x16x64xbf16> to vector<16x64xbf16>
    %cst = arith.constant dense<0.000000e+00> : vector<16x32xf32>
    %4 = tpu.matmul %3, %0, %cst {dimension_numbers = #tpu.dot_dimension_numbers<[1], [0], [0], [1], [0, 0, 1, 1], [], []>} : vector<16x64xbf16>, vector<64x32xbf16>, vector<16x32xf32> -> vector<16x32xf32>
    %5 = arith.addf %4, %1 : vector<16x32xf32>
    %c0_6 = arith.constant 0 : index
    %c0_7 = arith.constant 0 : index
    %c0_8 = arith.constant 0 : index
    %6 = vector.load %arg5[%c0_6, %c0_7, %c0_8] : memref<1x16x32xf32, #tpu.memory_space<vmem>>, vector<1x16x32xf32>
    %7 = vector.shape_cast %6 : vector<1x16x32xf32> to vector<16x32xf32>
    %8 = vector.shape_cast %5 : vector<16x32xf32> to vector<1x16x32xf32>
    tpu.vector_store %arg5[%c0_6, %c0_7, %c0_8], %8 {strides = array<i32>} : memref<1x16x32xf32, #tpu.memory_space<vmem>>, vector<1x16x32xf32>,
    return
  }
  func.func @transform_0(%arg0: i32, %arg1: i32) -> (i32, i32, i32) {
    %c0_i32 = arith.constant 0 : i32
    %c0_i32_0 = arith.constant 0 : i32
    return %arg0, %arg1, %c0_i32 : i32, i32, i32
  }
  func.func @transform_1(%arg0: i32, %arg1: i32) -> (i32, i32) {
    %c0_i32 = arith.constant 0 : i32
    %c0_i32_0 = arith.constant 0 : i32
    %c0_i32_1 = arith.constant 0 : i32
    return %c0_i32, %c0_i32_0 : i32, i32
  }
  func.func @transform_2(%arg0: i32, %arg1: i32) -> (i32, i32) {
    %c0_i32 = arith.constant 0 : i32
    %c0_i32_0 = arith.constant 0 : i32
    return %arg1, %c0_i32 : i32, i32
  }
  func.func @transform_3(%arg0: i32, %arg1: i32) -> (i32, i32, i32) {
    %c0_i32 = arith.constant 0 : i32
    %c0_i32_0 = arith.constant 0 : i32
    return %arg0, %arg1, %c0_i32 : i32, i32, i32
  }
}

</mosaic_0001>

<llo_original>
// kernel: tpu_custom_call.1
$region0: #{tpu_custom_call.1}
  #allocation0 [shape = 'u32[]', space=smem, size = 0x4, offset = 0x4, fixed_abs, tag = 'smem constant byte address 0x4 - core index']
  #allocation1 [shape = 'u32[144,128]{1,0:T(1,128)}', space=vmem, size = 0x12000, scoped, tag = 'internal scratch']
  %s0 = inlined_call_operand.vmem [shape: bf16[2,16,64], index: 0, kind: input, shape index: {}]
  %s1 = inlined_call_operand.vmem [shape: bf16[64,32], index: 1, kind: input, shape index: {}]
  %s2 = inlined_call_operand.vmem [shape: f32[16,32], index: 2, kind: input, shape index: {}]
  %s3 = inlined_call_operand.hbm [shape: f32[2,16,32], index: 3, kind: output, shape index: {}]
  %s4 = sld [smem:[#allocation0]]
  $region45: #{tpu_custom_call.1} parent=0
    _
  %s6 = ssub.s32 1, %s4
  %s7 = scalar_select 0, %s6, %s4
  $region1: #{tpu_custom_call.1} parent=0
    #allocation2 [shape = 'u8[16384]{0}', space=vmem, size = 0x4000, scoped, tag = 'output window, operand 0']
    #allocation3 [shape = 's32[2]{0}', space=sflag, size = 0x8, scoped, tag = 'scoped memory for tpu_custom_call.1']
    %8 = vsyncpa [#allocation3], 0
    %s9 = scalar_lea.sflag [#allocation3], 1
    %10 = vsyncpa %s9, 0
    loop: start=0, step=1, limit=4
    $region2: #{tpu_custom_call.1} parent=1 // loop_pre_header
      _
    $region3: #{tpu_custom_call.1} parent=1 // loop_header
      %s12 = sphi 0, %s16
      %p13 = scmp.ge.s32.totalorder %s12, 4
      %s19 = sphi 0, %s31
      %s20 = sphi 0, %s27
      %s21 = sphi 0, %s19
      %s22 = sphi 0, %s20
      %s23 = sphi 0, %s21
      %s24 = sphi 0, %s22
      %s36 = sphi 0, %s38
      %s39 = sphi 0, %s36
      %s40 = sphi 0, %s39
      %s56 = sphi 0, %s40
      %s60 = sphi 0, %s60
      %s62 = sphi 0, %s60
      %s63 = sphi 0, %s62
      %s77 = sphi 0, %s63
      %s83 = sphi 0, %s85
      %s86 = sphi 0, %s83
      %s87 = sphi 0, %s86
      %s103 = sphi 0, %s87
      %s111 = sphi 0, %s113
      %s114 = sphi 0, %s111
      %s115 = sphi 0, %s114
      %s131 = sphi 0, %s115
    $region4: #{tpu_custom_call.1} parent=1 // loop_header_branch
      %15 = sbr.rel (%p13) target = $region8
    $region5: #{tpu_custom_call.1} parent=1 // loop_body
      %s17 = ssub.s32 %s12, 1
      %s18 = ssub.s32 %s12, 2
      %s25 = sadd.s32 1, %s20
      %p26 = scmp.ge.s32.totalorder %s25, 1
      %s27 = scalar_select %p26, 0, %s25
      %s28 = sadd.s32 1, %s19
      %s29 = scalar_select %p26, %s28, %s19
      %p30 = scmp.ge.s32.totalorder %s29, 2
      %s31 = scalar_select %p30, 0, %s29
      %s32 = ssub.s32 %s19, %s31
      %s33 = ssub.s32 %s20, %s27
      %s34 = sor.u32 %s32, %s33
      %p35 = scmp.eq.s32.totalorder %s34, 0
      %s37 = sadd.s32 %s36, 1
      %s38 = scalar_select %p35, %s36, %s37
      %p41 = pneg %p35
      %p42 = scmp.eq.s32.totalorder %s12, 1
      %p43 = por %p41, %p42
      %p44 = scmp.ne.s32.totalorder %s36, %s39
      %p45 = scmp.eq.s32.totalorder %s12, 0
      %p46 = por %p44, %p45
      %p47 = scmp.ne.s32.totalorder %s36, %s39
      %p48 = scmp.eq.s32.totalorder %s17, 1
      %p49 = por %p47, %p48
      %p50 = scmp.ne.s32.totalorder %s39, %s40
      %p51 = scmp.eq.s32.totalorder %s17, 0
      %p52 = por %p50, %p51
      %p53 = scmp.ne.s32.totalorder %s39, %s40
      %p54 = scmp.eq.s32.totalorder %s18, 1
      %p55 = por %p53, %p54
      %p57 = scmp.ne.s32.totalorder %s40, %s56
      %p58 = scmp.eq.s32.totalorder %s18, 0
      %p59 = por %p57, %p58
      %s61 = sadd.s32 %s60, 1
      %p64 = scmp.eq.s32.totalorder %s12, 1
      %p65 = scmp.ne.s32.totalorder %s60, %s62
      %p66 = scmp.eq.s32.totalorder %s12, 0
      %p67 = por %p65, %p66
      %p68 = scmp.ne.s32.totalorder %s60, %s62
      %p69 = scmp.eq.s32.totalorder %s17, 1
      %p70 = por %p68, %p69
      %p71 = scmp.ne.s32.totalorder %s62, %s63
      %p72 = scmp.eq.s32.totalorder %s17, 0
      %p73 = por %p71, %p72
      %p74 = scmp.ne.s32.totalorder %s62, %s63
      %p75 = scmp.eq.s32.totalorder %s18, 1
      %p76 = por %p74, %p75
      %p78 = scmp.ne.s32.totalorder %s63, %s77
      %p79 = scmp.eq.s32.totalorder %s18, 0
      %p80 = por %p78, %p79
      %s81 = ssub.s32 %s20, %s27
      %p82 = scmp.eq.s32.totalorder %s81, 0
      %s84 = sadd.s32 %s83, 1
      %s85 = scalar_select %p82, %s83, %s84
      %p88 = pneg %p82
      %p89 = scmp.eq.s32.totalorder %s12, 1
      %p90 = por %p88, %p89
      %p91 = scmp.ne.s32.totalorder %s83, %s86
      %p92 = scmp.eq.s32.totalorder %s12, 0
      %p93 = por %p91, %p92
      %p94 = scmp.ne.s32.totalorder %s83, %s86
      %p95 = scmp.eq.s32.totalorder %s17, 1
      %p96 = por %p94, %p95
      %p97 = scmp.ne.s32.totalorder %s86, %s87
      %p98 = scmp.eq.s32.totalorder %s17, 0
      %p99 = por %p97, %p98
      %p100 = scmp.ne.s32.totalorder %s86, %s87
      %p101 = scmp.eq.s32.totalorder %s18, 1
      %p102 = por %p100, %p101
      %p104 = scmp.ne.s32.totalorder %s87, %s103
      %p105 = scmp.eq.s32.totalorder %s18, 0
      %p106 = por %p104, %p105
      %s107 = ssub.s32 %s19, %s31
      %s108 = ssub.s32 %s20, %s27
      %s109 = sor.u32 %s107, %s108
      %p110 = scmp.eq.s32.totalorder %s109, 0
      %s112 = sadd.s32 %s111, 1
      %s113 = scalar_select %p110, %s111, %s112
      %p116 = pneg %p110
      %p117 = scmp.eq.s32.totalorder %s12, 1
      %p118 = por %p116, %p117
      %p119 = scmp.ne.s32.totalorder %s111, %s114
      %p120 = scmp.eq.s32.totalorder %s12, 0
      %p121 = por %p119, %p120
      %p122 = scmp.ne.s32.totalorder %s111, %s114
      %p123 = scmp.eq.s32.totalorder %s17, 1
      %p124 = por %p122, %p123
      %p125 = scmp.ne.s32.totalorder %s114, %s115
      %p126 = scmp.eq.s32.totalorder %s17, 0
      %p127 = por %p125, %p126
      %p128 = scmp.ne.s32.totalorder %s114, %s115
      %p129 = scmp.eq.s32.totalorder %s18, 1
      %p130 = por %p128, %p129
      %p132 = scmp.ne.s32.totalorder %s115, %s131
      %p133 = scmp.eq.s32.totalorder %s18, 0
      %p134 = por %p132, %p133
      %p135 = scmp.le.s32.totalorder 1, %s12
      %p136 = scmp.lt.s32.totalorder %s12, 3
      %p137 = pnand %p135, %p136
      %p138 = pneg %p137
      // Predicated region
      $region9: #{tpu_custom_call.1} parent=5 // pred_check
        _
      $region10: #{tpu_custom_call.1} parent=5 // pred_check_branch
        %140 = sbr.rel (%p137) target = $region12
      $region11: #{tpu_custom_call.1} parent=5 // pred_region
        %s141 = ssub.s32 %s12, 1
        // Predicated region
        $region13: #{tpu_custom_call.1} parent=11 // pred_check
          %p142 = pneg %p73
        $region14: #{tpu_custom_call.1} parent=11 // pred_check_branch
          %144 = sbr.rel (%p142) target = $region16
        $region15: #{tpu_custom_call.1} parent=11 // pred_region
          _
        $region16: #{tpu_custom_call.1} parent=11 // pred_fallthru
          _
        // Predicated region
        $region17: #{tpu_custom_call.1} parent=11 // pred_check
          %p145 = pneg %p99
        $region18: #{tpu_custom_call.1} parent=11 // pred_check_branch
          %147 = sbr.rel (%p145) target = $region20
        $region19: #{tpu_custom_call.1} parent=11 // pred_region
          %s148 = smul.u32 2, %s22
          %p149 = scmp.lt.s32.totalorder %s148, 1
          %s150 = scalar_select %p149, %s148, 1
          %s151 = smul.addr %s150, 8
          %s152 = scalar_lea.vmem %s2, %s151
          %s153 = smul.u32 2, %s22
        $region20: #{tpu_custom_call.1} parent=11 // pred_fallthru
          _
      $region12: #{tpu_custom_call.1} parent=5 // pred_fallthru
        _
      %p154 = scmp.lt.s32.totalorder %s12, 2
      // Predicated region
      $region21: #{tpu_custom_call.1} parent=5 // pred_check
        %p155 = pneg %p154
      $region22: #{tpu_custom_call.1} parent=5 // pred_check_branch
        %157 = sbr.rel (%p155) target = $region24
      $region23: #{tpu_custom_call.1} parent=5 // pred_region
        // Predicated region
        $region25: #{tpu_custom_call.1} parent=23 // pred_check
          %p158 = pneg %p46
        $region26: #{tpu_custom_call.1} parent=23 // pred_check_branch
          %160 = sbr.rel (%p158) target = $region28
        $region27: #{tpu_custom_call.1} parent=23 // pred_region
          %s161 = smul.u32 2, %s20
          %p162 = scmp.lt.s32.totalorder %s19, 1
          %s163 = scalar_select %p162, %s19, 1
          %p164 = scmp.lt.s32.totalorder %s161, 1
          %s165 = scalar_select %p164, %s161, 1
          %s166 = smul.addr %s163, 2
          %s167 = sadd.s32 %s165, %s166
          %s168 = smul.addr %s167, 4
          %s169 = scalar_lea.vmem %s0, %s168
          %s170 = smul.u32 2, %s20
        $region28: #{tpu_custom_call.1} parent=23 // pred_fallthru
          _
      $region24: #{tpu_custom_call.1} parent=5 // pred_fallthru
        _
      %p171 = scmp.le.s32.totalorder 1, %s12
      %p172 = scmp.lt.s32.totalorder %s12, 3
      %p173 = pnand %p171, %p172
      %p174 = pneg %p173
      // Predicated region
      $region29: #{tpu_custom_call.1} parent=5 // pred_check
        _
      $region30: #{tpu_custom_call.1} parent=5 // pred_check_branch
        %176 = sbr.rel (%p173) target = $region32
      $region31: #{tpu_custom_call.1} parent=5 // pred_region
        %s177 = ssub.s32 %s12, 1
        %s178 = smul.u32 2, %s22
        %p179 = scmp.lt.s32.totalorder %s21, 1
        %s180 = scalar_select %p179, %s21, 1
        %p181 = scmp.lt.s32.totalorder %s178, 1
        %s182 = scalar_select %p181, %s178, 1
        %s183 = smul.addr %s180, 2
        %s184 = sadd.s32 %s182, %s183
        %s185 = smul.addr %s184, 4
        %s186 = scalar_lea.vmem %s0, %s185
        %p187 = pneg %p52
        %p188 = pneg %p49
        %p189 = pneg %p73
        %p190 = pneg %p70
        %s191 = smul.u32 2, %s22
        %p192 = scmp.lt.s32.totalorder %s191, 1
        %s193 = scalar_select %p192, %s191, 1
        %s194 = smul.addr %s193, 8
        %s195 = scalar_lea.vmem %s2, %s194
        %p196 = pneg %p99
        %p197 = pneg %p96
        %p198 = pneg %p127
        %p199 = pneg %p124
        %s200 = sand.u32 %s114, 1
        %s201 = scalar_lea.sflag [#allocation3], %s200
        %s202 = sand.u32 %s114, 1
        %s203 = smul.addr %s202, 16
        %s204 = scalar_lea.vmem [#allocation2], %s203
        %s205 = smul.u32 2, %s22
        %p206 = scmp.lt.s32.totalorder %s21, 1
        %s207 = scalar_select %p206, %s21, 1
        %p208 = scmp.lt.s32.totalorder %s205, 1
        %s209 = scalar_select %p208, %s205, 1
        %s210 = smul.addr %s207, 2
        %s211 = sadd.s32 %s209, %s210
        %s212 = smul.addr %s211, 4
        %s213 = scalar_lea.vmem %s0, %s212
        %s214 = smul.u32 2, %s22
        %s215 = smul.u32 2, %s22
        %p216 = scmp.lt.s32.totalorder %s215, 1
        %s217 = scalar_select %p216, %s215, 1
        %s218 = smul.addr %s217, 8
        %s219 = scalar_lea.vmem %s2, %s218
        %s220 = smul.u32 2, %s22
        %s221 = smul.u32 2, %s22
        %v223 = vld [vmem:[%s1] sm:$0xf]
        %v224 = vld [vmem:[%s1 + $0x4] sm:$0xf]
        %v225 = vld [vmem:[%s1 + $0x8] sm:$0xf]
        %v226 = vld [vmem:[%s1 + $0xc] sm:$0xf]
        %v227 = vld [vmem:[%s1 + $0x10] sm:$0xf]
        %v228 = vld [vmem:[%s1 + $0x14] sm:$0xf]
        %v229 = vld [vmem:[%s1 + $0x18] sm:$0xf]
        %v230 = vld [vmem:[%s1 + $0x1c] sm:$0xf]
        %v231 = vld [vmem:[%s219] sm:$0xff]
        %v232 = vld [vmem:[%s219 + $0x8] sm:$0xff]
        %v233 = vld [vmem:[%s213] sm:$0xf]
        %v234 = vld [vmem:[%s213 + $0x4] sm:$0xf]
        %v237 = vunpack.c.l.b16 %v233
        %v238 = vunpack.c.l.b16 %v234
        %v239 = vpack.c.b16 %v238, %v237
        %v248 = vunpack.c.l.b16 %v223
        %v249 = vunpack.c.l.b16 %v224
        %v250 = vunpack.c.l.b16 %v225
        %v251 = vunpack.c.l.b16 %v226
        %v252 = vunpack.c.l.b16 %v227
        %v253 = vunpack.c.l.b16 %v228
        %v254 = vunpack.c.l.b16 %v229
        %v255 = vunpack.c.l.b16 %v230
        %v256 = vpack.c.b16 %v249, %v248
        %v257 = vpack.c.b16 %v251, %v250
        %v258 = vpack.c.b16 %v253, %v252
        %v259 = vpack.c.b16 %v255, %v254
        %vm264 = vcmask 523264
        %v266 = vsel %vm264, %v239, 0
        %268 = vmatprep.subr.bf16.mxu0 0
        %269 = vmatpush1.bf16.msra.mxu0 %v256
        %270 = vmatprep.subr.bf16.mxu0 0
        %271 = vmatpush1.bf16.msra.mxu0 %v257
        %272 = vmatprep.subr.bf16.mxu0 0
        %273 = vmatpush1.bf16.msra.mxu0 %v258
        %274 = vmatprep.subr.bf16.mxu0 0
        %275 = vmatpush1.bf16.msra.mxu0 %v259
        %276 = vmatprep.subr.bf16.mxu0 0
        %277 = vmatpush1.bf16.msra.mxu0 0
        %278 = vmatprep.subr.bf16.mxu0 0
        %279 = vmatpush1.bf16.msra.mxu0 0
        %280 = vmatprep.subr.bf16.mxu0 0
        %281 = vmatpush1.bf16.msra.mxu0 0
        %282 = vmatprep.subr.bf16.mxu0 0
        %283 = vmatpush1.bf16.msra.mxu0 0
        %284 = vmatprep.subr.bf16.mxu0 0
        %285 = vmatpush1.bf16.msra.mxu0 0
        %286 = vmatprep.subr.bf16.mxu0 0
        %287 = vmatpush1.bf16.msra.mxu0 0
        %288 = vmatprep.subr.bf16.mxu0 0
        %289 = vmatpush1.bf16.msra.mxu0 0
        %290 = vmatprep.subr.bf16.mxu0 0
        %291 = vmatpush1.bf16.msra.mxu0 0
        %292 = vmatprep.subr.bf16.mxu0 0
        %293 = vmatpush1.bf16.msra.mxu0 0
        %294 = vmatprep.subr.bf16.mxu0 0
        %295 = vmatpush1.bf16.msra.mxu0 0
        %296 = vmatprep.subr.bf16.mxu0 0
        %297 = vmatpush1.bf16.msra.mxu0 0
        %298 = vmatprep.subr.bf16.mxu0 0
        %299 = vmatpush1.bf16.msra.mxu0 0
        %300 = vmatprep.mubr.bf16.mxu0 0
        %301 = vmatmul.mubr.bf16.gmra.mrb[0].mxu0 %v266
        %v302 = vpop.f32.mrb[0].mxu0
        %v303 = vadd.f32 %v231, %v302
        %v304 = vpop.f32.mrb[0].mxu0
        %v305 = vpop.f32.mrb[0].mxu0
        %v306 = vadd.f32 %v232, %v305
        %v307 = vpop.f32.mrb[0].mxu0
        %308 = vdwg.mxu0
        %vm309 = vcmask 261120
        %310 = vst.msk [vmem:[%s204] sm:$0xff] %vm309, %v303
        %311 = vst.msk [vmem:[%s204 + $0x8] sm:$0xff] %vm309, %v306
        %s312 = sand.u32 %s114, 1
        %s313 = scalar_lea.sflag [#allocation3], %s312
        %s314 = sand.u32 %s114, 1
        %s315 = smul.addr %s314, 16
        %s316 = scalar_lea.vmem [#allocation2], %s315
        // Predicated region
        $region33: #{tpu_custom_call.1} parent=31 // pred_check
          %p317 = pneg %p124
        $region34: #{tpu_custom_call.1} parent=31 // pred_check_branch
          %319 = sbr.rel (%p317) target = $region36
        $region35: #{tpu_custom_call.1} parent=31 // pred_region
          %s320 = smul.u32 2, %s22
          %s322 = ssub.s32 256, 256
          %323 = vsyncadd %s313, %s322
          %s324 = smul.addr %s21, 2
          %s325 = sadd.s32 %s320, %s324
          %s326 = smul.addr %s325, 128
          %s327 = scalar_lea.hbm %s3, %s326
          %s328 = sshll.u32 %s316, 4
          %s329 = int_to_ptr.vmem [resolvable:$true] %s328
          %334 = dma.vmem_to_hbm [thread:$0]  %s329, 256, %s327, %s313, 128, 128, 8
        $region36: #{tpu_custom_call.1} parent=31 // pred_fallthru
          _
      $region32: #{tpu_custom_call.1} parent=5 // pred_fallthru
        _
      %p335 = scmp.le.s32.totalorder 2, %s12
      // Predicated region
      $region37: #{tpu_custom_call.1} parent=5 // pred_check
        %p336 = pneg %p335
      $region38: #{tpu_custom_call.1} parent=5 // pred_check_branch
        %338 = sbr.rel (%p336) target = $region40
      $region39: #{tpu_custom_call.1} parent=5 // pred_region
        %s339 = ssub.s32 %s12, 2
        // Predicated region
        $region41: #{tpu_custom_call.1} parent=39 // pred_check
          %p340 = pneg %p130
        $region42: #{tpu_custom_call.1} parent=39 // pred_check_branch
          %342 = sbr.rel (%p340) target = $region44
        $region43: #{tpu_custom_call.1} parent=39 // pred_region
          %s343 = sand.u32 %s115, 1
          %s344 = scalar_lea.sflag [#allocation3], %s343
          %s345 = sand.u32 %s115, 1
          %s346 = smul.addr %s345, 16
          %s347 = scalar_lea.vmem [#allocation2], %s346
          %348 = dma.done %s344, 256
        $region44: #{tpu_custom_call.1} parent=39 // pred_fallthru
          _
      $region40: #{tpu_custom_call.1} parent=5 // pred_fallthru
        _
    $region6: #{tpu_custom_call.1} parent=1 // loop_footer
      %s16 = sadd.s32 1, %s12
    $region7: #{tpu_custom_call.1} parent=1 // loop_footer_branch
      %11 = sbr.rel target = $region3
    $region8: #{tpu_custom_call.1} parent=1 // loop_exit
      _
    %349 = vsyncpa [#allocation3], 1
    %s350 = scalar_lea.sflag [#allocation3], 1
    %351 = vsyncpa %s350, 1

</llo_original>
